<compile_context>
chip_gen: v7x
topology: tpu7x:2x2x1
jax: 0.10.0
libtpu: 0.0.40
codegen_flags: <defaults>
</compile_context>

<pallas_src>
import numpy as np
import jax
import jax.numpy as jnp
from jax.experimental import pallas as pl
from jax.experimental.pallas import tpu as pltpu

EPS = 1e-5
_VMEM_LIMIT_BYTES = 32 * 1024 * 1024  # explicit scoped-VMEM limit (safe on v5e/v6e/v7x)


def _patch_merging_kernel(x_ref, w_ref, b_ref, o_ref):
    # x_ref: (tm, 4C)  w_ref: (4C, 2C) bf16 (gamma folded)  b_ref: (1, 2C) f32
    # o_ref: (tm, 2C)
    x = x_ref[...].astype(jnp.float32)
    mean = jnp.mean(x, axis=-1, keepdims=True)
    centered = x - mean
    var = jnp.mean(centered * centered, axis=-1, keepdims=True)
    xn = centered * jax.lax.rsqrt(var + EPS)
    acc = jnp.dot(
        xn.astype(w_ref.dtype), w_ref[...], preferred_element_type=jnp.float32
    )
    o_ref[...] = (acc + b_ref[...]).astype(o_ref.dtype)


def _pick_tm(M, C4, C2, x_itemsize, out_itemsize, w_bytes, row_mult):
    """Row tile: big enough to amortize per-step overhead (~0.35us/step), small
    enough that double-buffered in/out tiles, the resident weight, AND the
    in-kernel f32 temporaries all fit the explicit 32 MiB scoped-VMEM limit."""
    target = 512
    budget = 16 * 1024 * 1024  # pipeline buffers + temporaries; half the limit
    # 2x-buffered input + ~3 f32 temporaries + bf16 xn copy, 2x-buffered output
    # + f32 accumulator.
    per_row = (2 * x_itemsize + 3 * 4 + 2) * C4 + (2 * out_itemsize + 4) * C2
    cap = max(row_mult, (budget - w_bytes) // max(per_row, 1))
    tm = min(target, int(cap))
    tm = max(row_mult, (tm // row_mult) * row_mult)
    if M <= tm:
        tm = ((M + row_mult - 1) // row_mult) * row_mult  # single tile
    return tm


def patch_merging(x, gamma, beta, weight, *, tm=None, mxu_dtype=jnp.bfloat16):
    """x: (B, L, C); gamma/beta: (4C,); weight: (2C, 4C) (torch Linear layout)."""
    B, L, C = x.shape
    assert L % 4 == 0, "sequence length must be divisible by 4"
    V = L // 4
    C4, C2 = 4 * C, 2 * C
    M = B * V

    # Free, contiguous "merge": 'b (v h) n -> b v (h n)'  ==  pure reshape.
    xm2d = x.reshape(M, C4)

    # Static permutation mapping our feature index k' = h*C + n back to the
    # module's index k = n*4 + h (applied only to the small parameters).
    kp = np.arange(C4)
    perm = (kp % C) * 4 + (kp // C)

    g = gamma.astype(jnp.float32)[perm]                        # (4C,)
    b = beta.astype(jnp.float32)[perm]                         # (4C,)
    w_t = jnp.transpose(weight.astype(jnp.float32))[perm, :]   # (4C, 2C)
    w_fused = (g[:, None] * w_t).astype(mxu_dtype)             # fold LN scale
    bias_fused = (b @ w_t).reshape(1, C2).astype(jnp.float32)  # fold LN shift

    x_itemsize = jnp.dtype(x.dtype).itemsize
    row_mult = 8 if x_itemsize >= 4 else 16
    w_bytes = C4 * C2 * jnp.dtype(mxu_dtype).itemsize
    if tm is None:
        tm = _pick_tm(M, C4, C2, x_itemsize, x_itemsize, w_bytes, row_mult)
    assert tm % row_mult == 0, "tm must respect the sublane packing multiple"

    # Ragged M: pad up to a tile multiple; padded rows are discarded afterwards.
    M_pad = pl.cdiv(M, tm) * tm
    if M_pad != M:
        xm2d = jnp.pad(xm2d, ((0, M_pad - M), (0, 0)))

    out2d = pl.pallas_call(
        _patch_merging_kernel,
        out_shape=jax.ShapeDtypeStruct((M_pad, C2), x.dtype),
        grid=(M_pad // tm,),
        in_specs=[
            pl.BlockSpec((tm, C4), lambda i: (i, 0)),
            pl.BlockSpec((C4, C2), lambda i: (0, 0)),   # resident fused weight
            pl.BlockSpec((1, C2), lambda i: (0, 0)),    # resident fused bias
        ],
        out_specs=pl.BlockSpec((tm, C2), lambda i: (i, 0)),
        compiler_params=pltpu.CompilerParams(
            dimension_semantics=("parallel",),
            vmem_limit_bytes=_VMEM_LIMIT_BYTES,
        ),
    )(xm2d, w_fused, bias_fused)

    if M_pad != M:
        out2d = out2d[:M]
    return out2d.reshape(B, V, C2)


def _reference(x, gamma, beta, weight):
    """Exact PyTorch-module semantics in f32 (rearrange + LayerNorm + Linear)."""
    B, L, C = x.shape
    V = L // 4
    xm = jnp.transpose(x.reshape(B, V, 4, C), (0, 1, 3, 2)).reshape(B, V, 4 * C)
    xf = xm.astype(jnp.float32)
    mean = jnp.mean(xf, axis=-1, keepdims=True)
    var = jnp.mean((xf - mean) ** 2, axis=-1, keepdims=True)
    xn = (xf - mean) * jax.lax.rsqrt(var + EPS) * gamma + beta
    return jnp.einsum("bvk,ok->bvo", xn, weight.astype(jnp.float32)).astype(x.dtype)


if __name__ == "__main__":
    # Small shapes consistent with the module: hidden_dim C=32, B=2, L=16 (V=4)
    B, L, C = 2, 16, 32
    key = jax.random.PRNGKey(0)
    kx, kw, kg, kb = jax.random.split(key, 4)

    x = jax.random.normal(kx, (B, L, C), dtype=jnp.float32)
    gamma = 1.0 + 0.1 * jax.random.normal(kg, (4 * C,), dtype=jnp.float32)
    beta = 0.1 * jax.random.normal(kb, (4 * C,), dtype=jnp.float32)
    weight = 0.02 * jax.random.normal(kw, (2 * C, 4 * C), dtype=jnp.float32)

    fn = jax.jit(patch_merging)
    out = jax.block_until_ready(fn(x, gamma, beta, weight))

    ref = _reference(x, gamma, beta, weight)
    assert out.shape == (B, L // 4, 2 * C)
    # bf16 MXU operands (f32 accumulate) vs exact f32 reference -> bf16-level tol.
    max_err = float(jnp.max(jnp.abs(out.astype(jnp.float32) - ref.astype(jnp.float32))))
    assert jnp.allclose(out, ref, atol=2e-2, rtol=2e-2), f"max_err={max_err}"

    print("KERNEL_OK")
</pallas_src>

<mosaic_0001>
module attributes {stable_mosaic.version = 11 : i64} {
  func.func @_patch_merging_kernel(%arg0: i32, %arg1: memref<8x128xf32, #tpu.memory_space<vmem>>, %arg2: memref<128x64xbf16, #tpu.memory_space<vmem>>, %arg3: memref<1x64xf32, #tpu.memory_space<vmem>>, %arg4: memref<8x64xf32, #tpu.memory_space<vmem>>) attributes {dimension_semantics = [#tpu.dimension_semantics<parallel>], iteration_bounds = array<i64: 1>, scalar_prefetch = 0 : i64, scratch_operands = 0 : i64, tpu.core_type = #tpu.core_type<tc>, window_params = [{transform_indices = @transform_0, window_bounds = array<i64: 8, 128>}, {pipeline_mode = #tpu.pipeline_mode<synchronous>, transform_indices = @transform_1, window_bounds = array<i64: 128, 64>}, {pipeline_mode = #tpu.pipeline_mode<synchronous>, transform_indices = @transform_2, window_bounds = array<i64: 1, 64>}, {transform_indices = @transform_3, window_bounds = array<i64: 8, 64>}]} {
    %c0 = arith.constant 0 : index
    %c0_0 = arith.constant 0 : index
    %0 = vector.load %arg1[%c0, %c0_0] : memref<8x128xf32, #tpu.memory_space<vmem>>, vector<8x128xf32>
    %cst = arith.constant dense<0.000000e+00> : vector<8xf32>
    %1 = vector.multi_reduction <add>, %0, %cst [1] : vector<8x128xf32> to vector<8xf32>
    %2 = vector.shape_cast %1 : vector<8xf32> to vector<8x1xf32>
    %cst_1 = arith.constant 1.280000e+02 : f32
    %3 = vector.broadcast %cst_1 : f32 to vector<8x1xf32>
    %4 = arith.divf %2, %3 : vector<8x1xf32>
    %5 = vector.broadcast %4 : vector<8x1xf32> to vector<8x128xf32>
    %6 = arith.subf %0, %5 : vector<8x128xf32>
    %7 = arith.mulf %6, %6 : vector<8x128xf32>
    %cst_2 = arith.constant dense<0.000000e+00> : vector<8xf32>
    %8 = vector.multi_reduction <add>, %7, %cst_2 [1] : vector<8x128xf32> to vector<8xf32>
    %9 = vector.shape_cast %8 : vector<8xf32> to vector<8x1xf32>
    %cst_3 = arith.constant 1.280000e+02 : f32
    %10 = vector.broadcast %cst_3 : f32 to vector<8x1xf32>
    %11 = arith.divf %9, %10 : vector<8x1xf32>
    %cst_4 = arith.constant 9.99999974E-6 : f32
    %12 = vector.broadcast %cst_4 : f32 to vector<8x1xf32>
    %13 = arith.addf %11, %12 : vector<8x1xf32>
    %14 = math.rsqrt %13 : vector<8x1xf32>
    %15 = vector.broadcast %14 : vector<8x1xf32> to vector<8x128xf32>
    %16 = arith.mulf %6, %15 : vector<8x128xf32>
    %17 = arith.truncf %16 : vector<8x128xf32> to vector<8x128xbf16>
    %c0_5 = arith.constant 0 : index
    %c0_6 = arith.constant 0 : index
    %18 = vector.load %arg2[%c0_5, %c0_6] : memref<128x64xbf16, #tpu.memory_space<vmem>>, vector<128x64xbf16>
    %cst_7 = arith.constant dense<0.000000e+00> : vector<8x64xf32>
    %19 = tpu.matmul %17, %18, %cst_7 {dimension_numbers = #tpu.dot_dimension_numbers<[1], [0], [0], [1], [0, 0, 1, 1], [], []>} : vector<8x128xbf16>, vector<128x64xbf16>, vector<8x64xf32> -> vector<8x64xf32>
    %c0_8 = arith.constant 0 : index
    %c0_9 = arith.constant 0 : index
    %20 = vector.load %arg3[%c0_8, %c0_9] : memref<1x64xf32, #tpu.memory_space<vmem>>, vector<1x64xf32>
    %21 = vector.broadcast %20 : vector<1x64xf32> to vector<8x64xf32>
    %22 = arith.addf %19, %21 : vector<8x64xf32>
    %c0_10 = arith.constant 0 : index
    %c0_11 = arith.constant 0 : index
    %23 = vector.load %arg4[%c0_10, %c0_11] : memref<8x64xf32, #tpu.memory_space<vmem>>, vector<8x64xf32>
    tpu.vector_store %arg4[%c0_10, %c0_11], %22 {strides = array<i32>} : memref<8x64xf32, #tpu.memory_space<vmem>>, vector<8x64xf32>,
    return
  }
  func.func @transform_0(%arg0: i32) -> (i32, i32) {
    %c0_i32 = arith.constant 0 : i32
    %c0_i32_0 = arith.constant 0 : i32
    return %arg0, %c0_i32 : i32, i32
  }
  func.func @transform_1(%arg0: i32) -> (i32, i32) {
    %c0_i32 = arith.constant 0 : i32
    %c0_i32_0 = arith.constant 0 : i32
    %c0_i32_1 = arith.constant 0 : i32
    return %c0_i32, %c0_i32_0 : i32, i32
  }
  func.func @transform_2(%arg0: i32) -> (i32, i32) {
    %c0_i32 = arith.constant 0 : i32
    %c0_i32_0 = arith.constant 0 : i32
    %c0_i32_1 = arith.constant 0 : i32
    return %c0_i32, %c0_i32_0 : i32, i32
  }
  func.func @transform_3(%arg0: i32) -> (i32, i32) {
    %c0_i32 = arith.constant 0 : i32
    %c0_i32_0 = arith.constant 0 : i32
    return %arg0, %c0_i32 : i32, i32
  }
}

</mosaic_0001>

<llo_original>
// kernel: patch_merging.1
$region0: #{patch_merging.1}
  #allocation0 [shape = 'u32[]', space=smem, size = 0x4, offset = 0x4, fixed_abs, tag = 'smem constant byte address 0x4 - core index']
  #allocation1 [shape = 'u32[144,128]{1,0:T(1,128)}', space=vmem, size = 0x12000, scoped, tag = 'internal scratch']
  %s0 = inlined_call_operand.vmem [shape: f32[8,128], index: 0, kind: input, shape index: {}]
  %s1 = inlined_call_operand.vmem [shape: bf16[128,64], index: 1, kind: input, shape index: {}]
  %s2 = inlined_call_operand.vmem [shape: f32[1,64], index: 2, kind: input, shape index: {}]
  %s3 = inlined_call_operand.hbm [shape: f32[8,64], index: 3, kind: output, shape index: {}]
  %s4 = sld [smem:[#allocation0]]
  $region22: #{patch_merging.1} parent=0
    _
  %s6 = ssub.s32 1, %s4
  %s7 = scalar_select 0, %s6, %s4
  $region1: #{patch_merging.1} parent=0
    #allocation2 [shape = 'u8[4096]{0}', space=vmem, size = 0x1000, scoped, tag = 'output window, operand 0, single buffered']
    #allocation3 [shape = 's32[1]{0}', space=sflag, size = 0x4, scoped, tag = 'scoped memory for patch_merging.1']
    %8 = vsyncpa [#allocation3], 0
    // Predicated region
    $region2: #{patch_merging.1} parent=1 // pred_check
      _
    $region3: #{patch_merging.1} parent=1 // pred_check_branch
      %10 = sbr.rel (0) target = $region5
    $region4: #{patch_merging.1} parent=1 // pred_region
      _
    $region5: #{patch_merging.1} parent=1 // pred_fallthru
      _
    // Predicated region
    $region6: #{patch_merging.1} parent=1 // pred_check
      _
    $region7: #{patch_merging.1} parent=1 // pred_check_branch
      %12 = sbr.rel (0) target = $region9
    $region8: #{patch_merging.1} parent=1 // pred_region
      _
    $region9: #{patch_merging.1} parent=1 // pred_fallthru
      _
    // Predicated region
    $region10: #{patch_merging.1} parent=1 // pred_check
      _
    $region11: #{patch_merging.1} parent=1 // pred_check_branch
      %14 = sbr.rel (0) target = $region13
    $region12: #{patch_merging.1} parent=1 // pred_region
      _
    $region13: #{patch_merging.1} parent=1 // pred_fallthru
      _
    %v16 = vld [vmem:[%s0] sm:$0xff]
    %17 = vadd.xlane.f32.xlu0 %v16
    %v18 = vpop.xlane.xlu0 %17
    %v19 = vrcp.pop 128.0
    %v20 = vmul.f32 %v18, %v19
    %v21 = vsub.f32 %v16, %v20
    %v22 = vmul.f32 %v21, %v21
    %23 = vadd.xlane.f32.xlu0 %v22
    %v24 = vpop.xlane.xlu0 %23
    %v25 = vmul.f32 %v24, %v19
    %v26 = vadd.f32 %v25, 1e-05
    %v27 = vrsqrt.pop %v26
    %v28 = vmul.f32 %v21, %v27
    %v29 = vpack.c.bf16 %v28, %v28
    %v30 = vld [vmem:[%s1] sm:$0xf]
    %v31 = vld [vmem:[%s1 + $0x4] sm:$0xf]
    %v32 = vld [vmem:[%s1 + $0x8] sm:$0xf]
    %v33 = vld [vmem:[%s1 + $0xc] sm:$0xf]
    %v34 = vld [vmem:[%s1 + $0x10] sm:$0xf]
    %v35 = vld [vmem:[%s1 + $0x14] sm:$0xf]
    %v36 = vld [vmem:[%s1 + $0x18] sm:$0xf]
    %v37 = vld [vmem:[%s1 + $0x1c] sm:$0xf]
    %v38 = vld [vmem:[%s1 + $0x20] sm:$0xf]
    %v39 = vld [vmem:[%s1 + $0x24] sm:$0xf]
    %v40 = vld [vmem:[%s1 + $0x28] sm:$0xf]
    %v41 = vld [vmem:[%s1 + $0x2c] sm:$0xf]
    %v42 = vld [vmem:[%s1 + $0x30] sm:$0xf]
    %v43 = vld [vmem:[%s1 + $0x34] sm:$0xf]
    %v44 = vld [vmem:[%s1 + $0x38] sm:$0xf]
    %v45 = vld [vmem:[%s1 + $0x3c] sm:$0xf]
    %v46 = vld [vmem:[%s2] sm:$0x1]
    %v48 = vlaneseq
    %v49 = vshrl.u32 %v48, 7
    %v50 = vsub.s32 0, %v49
    %v51 = vrot.slane %v46, %v50
    %v69 = vunpack.c.l.b16 %v30
    %v70 = vunpack.c.l.b16 %v31
    %v71 = vunpack.c.l.b16 %v32
    %v72 = vunpack.c.l.b16 %v33
    %v73 = vunpack.c.l.b16 %v34
    %v74 = vunpack.c.l.b16 %v35
    %v75 = vunpack.c.l.b16 %v36
    %v76 = vunpack.c.l.b16 %v37
    %v77 = vunpack.c.l.b16 %v38
    %v78 = vunpack.c.l.b16 %v39
    %v79 = vunpack.c.l.b16 %v40
    %v80 = vunpack.c.l.b16 %v41
    %v81 = vunpack.c.l.b16 %v42
    %v82 = vunpack.c.l.b16 %v43
    %v83 = vunpack.c.l.b16 %v44
    %v84 = vunpack.c.l.b16 %v45
    %v85 = vpack.c.b16 %v70, %v69
    %v86 = vpack.c.b16 %v72, %v71
    %v87 = vpack.c.b16 %v74, %v73
    %v88 = vpack.c.b16 %v76, %v75
    %v89 = vpack.c.b16 %v78, %v77
    %v90 = vpack.c.b16 %v80, %v79
    %v91 = vpack.c.b16 %v82, %v81
    %v92 = vpack.c.b16 %v84, %v83
    %101 = vmatprep.subr.bf16.mxu0 0
    %102 = vmatpush1.bf16.msra.mxu0 %v85
    %103 = vmatprep.subr.bf16.mxu0 0
    %104 = vmatpush1.bf16.msra.mxu0 %v86
    %105 = vmatprep.subr.bf16.mxu0 0
    %106 = vmatpush1.bf16.msra.mxu0 %v87
    %107 = vmatprep.subr.bf16.mxu0 0
    %108 = vmatpush1.bf16.msra.mxu0 %v88
    %109 = vmatprep.subr.bf16.mxu0 0
    %110 = vmatpush1.bf16.msra.mxu0 %v89
    %111 = vmatprep.subr.bf16.mxu0 0
    %112 = vmatpush1.bf16.msra.mxu0 %v90
    %113 = vmatprep.subr.bf16.mxu0 0
    %114 = vmatpush1.bf16.msra.mxu0 %v91
    %115 = vmatprep.subr.bf16.mxu0 0
    %116 = vmatpush1.bf16.msra.mxu0 %v92
    %117 = vmatprep.subr.bf16.mxu0 0
    %118 = vmatpush1.bf16.msra.mxu0 0
    %119 = vmatprep.subr.bf16.mxu0 0
    %120 = vmatpush1.bf16.msra.mxu0 0
    %121 = vmatprep.subr.bf16.mxu0 0
    %122 = vmatpush1.bf16.msra.mxu0 0
    %123 = vmatprep.subr.bf16.mxu0 0
    %124 = vmatpush1.bf16.msra.mxu0 0
    %125 = vmatprep.subr.bf16.mxu0 0
    %126 = vmatpush1.bf16.msra.mxu0 0
    %127 = vmatprep.subr.bf16.mxu0 0
    %128 = vmatpush1.bf16.msra.mxu0 0
    %129 = vmatprep.subr.bf16.mxu0 0
    %130 = vmatpush1.bf16.msra.mxu0 0
    %131 = vmatprep.subr.bf16.mxu0 0
    %132 = vmatpush1.bf16.msra.mxu0 0
    %133 = vmatprep.mubr.bf16.mxu0 0
    %134 = vmatmul.mubr.bf16.gmra.mrb[0].mxu0 %v29
    %v135 = vpop.f32.mrb[0].mxu0
    %v136 = vadd.f32 %v51, %v135
    %v137 = vpop.f32.mrb[0].mxu0
    %v138 = vpop.f32.mrb[0].mxu0
    %v139 = vpop.f32.mrb[0].mxu0
    %140 = vdwg.mxu0
    %vm141 = vcmask 523264
    %142 = vst.msk [vmem:[#allocation2] sm:$0xff] %vm141, %v136
    // Predicated region
    $region14: #{patch_merging.1} parent=1 // pred_check
      _
    $region15: #{patch_merging.1} parent=1 // pred_check_branch
      %144 = sbr.rel (0) target = $region17
    $region16: #{patch_merging.1} parent=1 // pred_region
      %s146 = ssub.s32 128, 128
      %147 = vsyncadd [#allocation3], %s146
      %s149 = sshll.u32 [#allocation2], 4
      %s150 = int_to_ptr.vmem [resolvable:$true] %s149
      %152 = dma.vmem_to_hbm [thread:$0]  %s150, 128, %s3, [#allocation3]
    $region17: #{patch_merging.1} parent=1 // pred_fallthru
      _
    // Predicated region
    $region18: #{patch_merging.1} parent=1 // pred_check
      _
    $region19: #{patch_merging.1} parent=1 // pred_check_branch
      %154 = sbr.rel (0) target = $region21
    $region20: #{patch_merging.1} parent=1 // pred_region
      %155 = dma.done [#allocation3], 128
    $region21: #{patch_merging.1} parent=1 // pred_fallthru
      _
    %156 = vsyncpa [#allocation3], 1

</llo_original>
